<compile_context>
chip_gen: v7x
topology: tpu7x:2x2x1
jax: 0.10.0
libtpu: 0.0.40
codegen_flags: <defaults>
</compile_context>

<pallas_src>
import itertools
import numpy as np
import jax
import jax.numpy as jnp
from jax.experimental import pallas as pl
from jax.experimental.pallas import tpu as pltpu


def _round_up(x, m):
    return (x + m - 1) // m * m


# ----------------------------------------------------------------------------
# Pallas kernel: HW-tiled similarity accumulation
# ----------------------------------------------------------------------------
def _matching_sim_kernel(term1_ref, mp_ref, mgt_ref, sim_ref,
                         num_acc, sp_acc, sg_acc):
    # term1_ref: (bb, Np, Kp) f32   mp_ref: (bb, Np, thw) bf16
    # mgt_ref  : (bb, Kp, thw) bf16 sim_ref: (bb, Np, Kp) f32
    hw = pl.program_id(1)

    @pl.when(hw == 0)
    def _():
        num_acc[...] = jnp.zeros_like(num_acc)
        sp_acc[...] = jnp.zeros_like(sp_acc)
        sg_acc[...] = jnp.zeros_like(sg_acc)

    mp = mp_ref[...]                       # (bb, Np, thw) bf16
    mg = mgt_ref[...]                      # (bb, Kp, thw) bf16

    # Cross term on the MXU, f32 accumulation.
    num_acc[...] += jnp.einsum('bnh,bkh->bnk', mp, mg,
                               preferred_element_type=jnp.float32)

    # sum_h m_p^2 : upcast once, lane reduce, f32 accumulate.  (bb, Np, 1)
    mpf = mp.astype(jnp.float32)
    sp_acc[...] += jnp.sum(mpf * mpf, axis=-1, keepdims=True)

    # sum_h m_gt^2 : push through the MXU with a ones LHS so the per-k sums
    # land lane-major (k on lanes) — no cross-lane relayout needed.
    ones_lhs = jnp.ones((mg.shape[0], 8, mg.shape[2]), dtype=mg.dtype)
    sg_acc[...] += jnp.einsum('bih,bkh->bik', ones_lhs, mg * mg,
                              preferred_element_type=jnp.float32)

    @pl.when(hw == pl.num_programs(1) - 1)
    def _():
        # denom == 0 (both masks all-zero) yields inf/NaN, matching the
        # PyTorch reference; padded rows/cols are sliced off by the wrapper.
        denom = sp_acc[...] + sg_acc[...][:, 0:1, :]        # (bb, Np, Kp)
        term2 = 2.0 * num_acc[...] * pl.reciprocal(denom, approx=True)
        sim_ref[...] = (term1_ref[...] * term2).astype(sim_ref.dtype)


def _pick_batch_block(B, Np, Kp, thw, budget_bytes=24 << 20):
    """Largest divisor of B that keeps >=2 batch grid steps and fits VMEM."""
    if B <= 1:
        return 1
    for bb in [d for d in range(B // 2, 0, -1) if B % d == 0]:
        est = (2 * bb * (Np + Kp) * thw * 2          # double-buffered bf16 masks
               + 2 * 2 * bb * Np * Kp * 4            # term1 + output blocks (f32)
               + bb * (Np * Kp + Np + 8 * Kp) * 4)   # f32 accumulators
        if est <= budget_bytes:
            return bb
    return 1


def matching_sim(y_p, y_gt, m_p, m_gt):
    """sim[b, n, k] as in HungarianMatcher.matching_sim (f32; bf16 mask math)."""
    B, N = y_p.shape
    K = y_gt.shape[-1]
    H, W = m_p.shape[-2], m_p.shape[-1]
    HW = H * W

    Np = _round_up(max(N, 8), 8)
    Kp = _round_up(max(K, 128), 128)
    thw = min(_round_up(HW, 128), 2048)      # HW tile (sized for v7x's 64MiB VMEM)
    HWp = _round_up(HW, thw)
    bb = _pick_batch_block(B, Np, Kp, thw)

    # term1 = y_p*y_gt + (1-y_p)*(1-y_gt), precomputed (tiny) and padded.
    yp = jnp.pad(y_p.astype(jnp.float32), ((0, 0), (0, Np - N)))
    ygt = jnp.pad(y_gt.astype(jnp.float32), ((0, 0), (0, Kp - K)))
    term1 = (yp[:, :, None] * ygt[:, None, :]
             + (1.0 - yp[:, :, None]) * (1.0 - ygt[:, None, :]))

    # Masks: flatten, cast to bf16, zero-pad rows and HW (exact contributions).
    mp = jnp.pad(m_p.reshape(B, N, HW).astype(jnp.bfloat16),
                 ((0, 0), (0, Np - N), (0, HWp - HW)))
    mgt = jnp.pad(m_gt.reshape(B, K, HW).astype(jnp.bfloat16),
                  ((0, 0), (0, Kp - K), (0, HWp - HW)))

    grid = (B // bb, HWp // thw)

    grid_spec = pltpu.PrefetchScalarGridSpec(
        num_scalar_prefetch=0,
        grid=grid,
        in_specs=[
            pl.BlockSpec((bb, Np, Kp), lambda b, h: (b, 0, 0)),
            pl.BlockSpec((bb, Np, thw), lambda b, h: (b, 0, h)),
            pl.BlockSpec((bb, Kp, thw), lambda b, h: (b, 0, h)),
        ],
        out_specs=pl.BlockSpec((bb, Np, Kp), lambda b, h: (b, 0, 0)),
        scratch_shapes=[
            pltpu.VMEM((bb, Np, Kp), jnp.float32),   # num accumulator
            pltpu.VMEM((bb, Np, 1), jnp.float32),    # sum m_p^2
            pltpu.VMEM((bb, 8, Kp), jnp.float32),    # sum m_gt^2 (lane-major)
        ],
    )

    sim_padded = pl.pallas_call(
        _matching_sim_kernel,
        out_shape=jax.ShapeDtypeStruct((B, Np, Kp), jnp.float32),
        grid_spec=grid_spec,
        compiler_params=pltpu.CompilerParams(
            dimension_semantics=("parallel", "arbitrary"),
            vmem_limit_bytes=48 << 20,   # under v7x 64MiB physical; plenty on v5e/v6e
        ),
    )(term1, mp, mgt)

    return sim_padded[:, :N, :K]


# ----------------------------------------------------------------------------
# Host-side linear sum assignment (maximize).  Brute force over permutations
# for the small synthetic shapes used here (self-contained, no scipy).
# TODO(synk): Hungarian assignment is data-dependent sequential host logic; it
#             has no clean Pallas equivalent and stays off-device (as in the
#             original module, which runs it on CPU).
# ----------------------------------------------------------------------------
def _linear_sum_assignment_max(s):
    """s: (N, e) float array. Returns (row_ind, col_ind) sorted by row."""
    n_rows, n_cols = s.shape
    best_rows, best_val = None, -np.inf
    for rows in itertools.permutations(range(n_rows), n_cols):
        val = s[list(rows), np.arange(n_cols)].sum()
        if val > best_val:
            best_val, best_rows = val, rows
    rows = np.asarray(best_rows, dtype=np.int64)
    cols = np.arange(n_cols, dtype=np.int64)
    order = np.argsort(rows)
    return rows[order], cols[order]


# ----------------------------------------------------------------------------
# HungarianMatcher.forward equivalent
# ----------------------------------------------------------------------------
def hungarian_matcher_forward(y_p, y_gt, m_p, m_gt, gt_size):
    B, N = y_p.shape
    sim = matching_sim(y_p, y_gt, m_p, m_gt)        # Pallas kernel (hot path)
    sim_host = np.asarray(jax.device_get(sim))
    gt_size_host = np.asarray(jax.device_get(gt_size)).astype(np.int64)

    indices = [
        _linear_sum_assignment_max(sim_host[b][:, : int(gt_size_host[b])])
        for b in range(B)
    ]

    input_indices = np.arange(N)
    input_pos, target_pos, input_neg = [], [], []
    batch_pos, batch_neg = [], []
    for i, (inp_idx, tgt_idx) in enumerate(indices):
        neg_idx = np.setdiff1d(input_indices, inp_idx)
        input_pos.append(inp_idx)
        target_pos.append(tgt_idx)
        input_neg.append(neg_idx)
        batch_pos.append(np.full_like(inp_idx, i))
        batch_neg.append(np.full_like(neg_idx, i))

    batch_pos_idx = jnp.asarray(np.concatenate(batch_pos), dtype=jnp.int32)
    batch_neg_idx = jnp.asarray(np.concatenate(batch_neg), dtype=jnp.int32)
    input_pos_indices = jnp.asarray(np.concatenate(input_pos), dtype=jnp.int32)
    target_pos_indices = jnp.asarray(np.concatenate(target_pos), dtype=jnp.int32)
    input_neg_indices = jnp.asarray(np.concatenate(input_neg), dtype=jnp.int32)

    inp_pos_indices = (batch_pos_idx, input_pos_indices)
    gt_pos_indices = (batch_pos_idx, target_pos_indices)
    inp_neg_indices = (batch_neg_idx, input_neg_indices)
    return inp_pos_indices, gt_pos_indices, inp_neg_indices


# ----------------------------------------------------------------------------
# Pure-JAX f32 reference for the similarity matrix (correctness check)
# ----------------------------------------------------------------------------
def _matching_sim_ref(y_p, y_gt, m_p, m_gt):
    yp = y_p[:, :, None]
    ygt = y_gt[:, None, :]
    term1 = yp * ygt + (1 - yp) * (1 - ygt)
    mp = m_p.reshape(m_p.shape[0], m_p.shape[1], 1, -1)
    mgt = m_gt.reshape(m_gt.shape[0], 1, m_gt.shape[1], -1)
    numerator = 2 * (mp * mgt).sum(-1)
    denominator = (mp ** 2).sum(-1) + (mgt ** 2).sum(-1)
    return term1 * (numerator / denominator)


if __name__ == "__main__":
    B, N, K, H, W = 2, 8, 8, 16, 16

    key = jax.random.PRNGKey(0)
    k1, k2, k3, k4 = jax.random.split(key, 4)

    y_p = jax.nn.sigmoid(jax.random.normal(k1, (B, N), dtype=jnp.float32))
    y_gt = jax.random.bernoulli(k2, 0.5, (B, K)).astype(jnp.float32)
    m_p = jax.nn.sigmoid(jax.random.normal(k3, (B, N, H, W), dtype=jnp.float32))
    m_gt = jax.random.bernoulli(k4, 0.5, (B, K, H, W)).astype(jnp.float32)
    gt_size = jnp.array([5, 3], dtype=jnp.int32)

    # Kernel similarity vs pure-JAX f32 reference (bf16 masks + approx
    # reciprocal => loosened tolerance vs the exact f32 path).
    sim_kernel = jax.block_until_ready(matching_sim(y_p, y_gt, m_p, m_gt))
    sim_ref = _matching_sim_ref(y_p, y_gt, m_p, m_gt)
    assert np.allclose(np.asarray(sim_kernel), np.asarray(sim_ref),
                       rtol=2e-2, atol=2e-2)

    # Full forward pass
    (inp_pos, gt_pos, inp_neg) = hungarian_matcher_forward(
        y_p, y_gt, m_p, m_gt, gt_size)
    jax.block_until_ready(inp_pos[0])
    jax.block_until_ready(gt_pos[1])
    jax.block_until_ready(inp_neg[1])

    print("KERNEL_OK")
</pallas_src>

<mosaic_0001>
module attributes {stable_mosaic.version = 11 : i64} {
  func.func @_matching_sim_kernel(%arg0: i32, %arg1: i32, %arg2: memref<1x8x128xf32, #tpu.memory_space<vmem>>, %arg3: memref<1x8x256xbf16, #tpu.memory_space<vmem>>, %arg4: memref<1x128x256xbf16, #tpu.memory_space<vmem>>, %arg5: memref<1x8x128xf32, #tpu.memory_space<vmem>>, %arg6: memref<1x8x128xf32, #tpu.memory_space<vmem>>, %arg7: memref<1x8x1xf32, #tpu.memory_space<vmem>>, %arg8: memref<1x8x128xf32, #tpu.memory_space<vmem>>) attributes {dimension_semantics = [#tpu.dimension_semantics<parallel>, #tpu.dimension_semantics<arbitrary>], iteration_bounds = array<i64: 2, 1>, scalar_prefetch = 0 : i64, scratch_operands = 3 : i64, tpu.core_type = #tpu.core_type<tc>, window_params = [{transform_indices = @transform_0, window_bounds = array<i64: 1, 8, 128>}, {transform_indices = @transform_1, window_bounds = array<i64: 1, 8, 256>}, {transform_indices = @transform_2, window_bounds = array<i64: 1, 128, 256>}, {transform_indices = @transform_3, window_bounds = array<i64: 1, 8, 128>}]} {
    %c0_i32 = arith.constant 0 : i32
    %0 = arith.cmpi eq, %arg1, %c0_i32 : i32
    %1 = arith.extui %0 : i1 to i32
    %c0_i32_0 = arith.constant 0 : i32
    %2 = arith.cmpi ne, %1, %c0_i32_0 : i32
    scf.if %2 {
      %cst_29 = arith.constant 0.000000e+00 : f32
      %25 = vector.broadcast %cst_29 : f32 to vector<1x8x128xf32>
      %c0_30 = arith.constant 0 : index
      %c0_31 = arith.constant 0 : index
      %c0_32 = arith.constant 0 : index
      %26 = vector.load %arg6[%c0_30, %c0_31, %c0_32] : memref<1x8x128xf32, #tpu.memory_space<vmem>>, vector<1x8x128xf32>
      tpu.vector_store %arg6[%c0_30, %c0_31, %c0_32], %25 {strides = array<i32>} : memref<1x8x128xf32, #tpu.memory_space<vmem>>, vector<1x8x128xf32>,
      %cst_33 = arith.constant 0.000000e+00 : f32
      %27 = vector.broadcast %cst_33 : f32 to vector<1x8x1xf32>
      %c0_34 = arith.constant 0 : index
      %c0_35 = arith.constant 0 : index
      %c0_36 = arith.constant 0 : index
      %28 = vector.load %arg7[%c0_34, %c0_35, %c0_36] : memref<1x8x1xf32, #tpu.memory_space<vmem>>, vector<1x8x1xf32>
      tpu.vector_store %arg7[%c0_34, %c0_35, %c0_36], %27 {strides = array<i32>} : memref<1x8x1xf32, #tpu.memory_space<vmem>>, vector<1x8x1xf32>,
      %cst_37 = arith.constant 0.000000e+00 : f32
      %29 = vector.broadcast %cst_37 : f32 to vector<1x8x128xf32>
      %c0_38 = arith.constant 0 : index
      %c0_39 = arith.constant 0 : index
      %c0_40 = arith.constant 0 : index
      %30 = vector.load %arg8[%c0_38, %c0_39, %c0_40] : memref<1x8x128xf32, #tpu.memory_space<vmem>>, vector<1x8x128xf32>
      tpu.vector_store %arg8[%c0_38, %c0_39, %c0_40], %29 {strides = array<i32>} : memref<1x8x128xf32, #tpu.memory_space<vmem>>, vector<1x8x128xf32>,
    } else {
    }
    %c0 = arith.constant 0 : index
    %c0_1 = arith.constant 0 : index
    %c0_2 = arith.constant 0 : index
    %3 = vector.load %arg3[%c0, %c0_1, %c0_2] : memref<1x8x256xbf16, #tpu.memory_space<vmem>>, vector<1x8x256xbf16>
    %c0_3 = arith.constant 0 : index
    %c0_4 = arith.constant 0 : index
    %c0_5 = arith.constant 0 : index
    %4 = vector.load %arg4[%c0_3, %c0_4, %c0_5] : memref<1x128x256xbf16, #tpu.memory_space<vmem>>, vector<1x128x256xbf16>
    %c0_6 = arith.constant 0 : index
    %c0_7 = arith.constant 0 : index
    %c0_8 = arith.constant 0 : index
    %5 = vector.load %arg6[%c0_6, %c0_7, %c0_8] : memref<1x8x128xf32, #tpu.memory_space<vmem>>, vector<1x8x128xf32>
    "tpu.trace_start"() <{level = 10 : i32, message = "bnh,bkh->bnk"}> : () -> ()
    %cst = arith.constant dense<0.000000e+00> : vector<1x8x128xf32>
    %6 = tpu.matmul %3, %4, %cst {dimension_numbers = #tpu.dot_dimension_numbers<[2], [2], [1], [1], [0, 0, 0, 1, 1, 1], [0], [0]>} : vector<1x8x256xbf16>, vector<1x128x256xbf16>, vector<1x8x128xf32> -> vector<1x8x128xf32>
    "tpu.trace_stop"() : () -> ()
    %7 = arith.addf %5, %6 : vector<1x8x128xf32>
    %c0_9 = arith.constant 0 : index
    %c0_10 = arith.constant 0 : index
    %c0_11 = arith.constant 0 : index
    %8 = vector.load %arg6[%c0_9, %c0_10, %c0_11] : memref<1x8x128xf32, #tpu.memory_space<vmem>>, vector<1x8x128xf32>
    tpu.vector_store %arg6[%c0_9, %c0_10, %c0_11], %7 {strides = array<i32>} : memref<1x8x128xf32, #tpu.memory_space<vmem>>, vector<1x8x128xf32>,
    %9 = arith.extf %3 : vector<1x8x256xbf16> to vector<1x8x256xf32>
    %c0_12 = arith.constant 0 : index
    %c0_13 = arith.constant 0 : index
    %c0_14 = arith.constant 0 : index
    %10 = vector.load %arg7[%c0_12, %c0_13, %c0_14] : memref<1x8x1xf32, #tpu.memory_space<vmem>>, vector<1x8x1xf32>
    %11 = arith.mulf %9, %9 : vector<1x8x256xf32>
    %cst_15 = arith.constant dense<0.000000e+00> : vector<1x8xf32>
    %12 = vector.multi_reduction <add>, %11, %cst_15 [2] : vector<1x8x256xf32> to vector<1x8xf32>
    %13 = vector.shape_cast %12 : vector<1x8xf32> to vector<1x8x1xf32>
    %14 = arith.addf %10, %13 : vector<1x8x1xf32>
    %c0_16 = arith.constant 0 : index
    %c0_17 = arith.constant 0 : index
    %c0_18 = arith.constant 0 : index
    %15 = vector.load %arg7[%c0_16, %c0_17, %c0_18] : memref<1x8x1xf32, #tpu.memory_space<vmem>>, vector<1x8x1xf32>
    tpu.vector_store %arg7[%c0_16, %c0_17, %c0_18], %14 {strides = array<i32>} : memref<1x8x1xf32, #tpu.memory_space<vmem>>, vector<1x8x1xf32>,
    %cst_19 = arith.constant 1.000000e+00 : bf16
    %16 = vector.broadcast %cst_19 : bf16 to vector<1x8x256xbf16>
    %c0_20 = arith.constant 0 : index
    %c0_21 = arith.constant 0 : index
    %c0_22 = arith.constant 0 : index
    %17 = vector.load %arg8[%c0_20, %c0_21, %c0_22] : memref<1x8x128xf32, #tpu.memory_space<vmem>>, vector<1x8x128xf32>
    %18 = arith.mulf %4, %4 : vector<1x128x256xbf16>
    "tpu.trace_start"() <{level = 10 : i32, message = "bih,bkh->bik"}> : () -> ()
    %cst_23 = arith.constant dense<0.000000e+00> : vector<1x8x128xf32>
    %19 = tpu.matmul %16, %18, %cst_23 {dimension_numbers = #tpu.dot_dimension_numbers<[2], [2], [1], [1], [0, 0, 0, 1, 1, 1], [0], [0]>} : vector<1x8x256xbf16>, vector<1x128x256xbf16>, vector<1x8x128xf32> -> vector<1x8x128xf32>
    "tpu.trace_stop"() : () -> ()
    %20 = arith.addf %17, %19 : vector<1x8x128xf32>
    %c0_24 = arith.constant 0 : index
    %c0_25 = arith.constant 0 : index
    %c0_26 = arith.constant 0 : index
    %21 = vector.load %arg8[%c0_24, %c0_25, %c0_26] : memref<1x8x128xf32, #tpu.memory_space<vmem>>, vector<1x8x128xf32>
    tpu.vector_store %arg8[%c0_24, %c0_25, %c0_26], %20 {strides = array<i32>} : memref<1x8x128xf32, #tpu.memory_space<vmem>>, vector<1x8x128xf32>,
    %c0_i32_27 = arith.constant 0 : i32
    %22 = arith.cmpi eq, %arg1, %c0_i32_27 : i32
    %23 = arith.extui %22 : i1 to i32
    %c0_i32_28 = arith.constant 0 : i32
    %24 = arith.cmpi ne, %23, %c0_i32_28 : i32
    scf.if %24 {
      %c0_29 = arith.constant 0 : index
      %c0_30 = arith.constant 0 : index
      %c0_31 = arith.constant 0 : index
      %25 = vector.load %arg7[%c0_29, %c0_30, %c0_31] : memref<1x8x1xf32, #tpu.memory_space<vmem>>, vector<1x8x1xf32>
      %c0_32 = arith.constant 0 : index
      %c0_33 = arith.constant 0 : index
      %c0_34 = arith.constant 0 : index
      %26 = vector.load %arg8[%c0_32, %c0_33, %c0_34] : memref<1x8x128xf32, #tpu.memory_space<vmem>>, vector<1x8x128xf32>
      %27 = vector.extract_strided_slice %26 {offsets = [0, 0, 0], sizes = [1, 1, 128], strides = [1, 1, 1]} : vector<1x8x128xf32> to vector<1x1x128xf32>
      %28 = vector.broadcast %25 : vector<1x8x1xf32> to vector<1x8x128xf32>
      %29 = vector.broadcast %27 : vector<1x1x128xf32> to vector<1x8x128xf32>
      %30 = arith.addf %28, %29 : vector<1x8x128xf32>
      %c0_35 = arith.constant 0 : index
      %c0_36 = arith.constant 0 : index
      %c0_37 = arith.constant 0 : index
      %31 = vector.load %arg6[%c0_35, %c0_36, %c0_37] : memref<1x8x128xf32, #tpu.memory_space<vmem>>, vector<1x8x128xf32>
      %cst_38 = arith.constant 2.000000e+00 : f32
      %32 = vector.broadcast %cst_38 : f32 to vector<1x8x128xf32>
      %33 = arith.mulf %32, %31 : vector<1x8x128xf32>
      %34 = tpu.reciprocal %30 {approx = true} : vector<1x8x128xf32> -> vector<1x8x128xf32>
      %35 = arith.mulf %33, %34 : vector<1x8x128xf32>
      %c0_39 = arith.constant 0 : index
      %c0_40 = arith.constant 0 : index
      %c0_41 = arith.constant 0 : index
      %36 = vector.load %arg2[%c0_39, %c0_40, %c0_41] : memref<1x8x128xf32, #tpu.memory_space<vmem>>, vector<1x8x128xf32>
      %37 = arith.mulf %36, %35 : vector<1x8x128xf32>
      %c0_42 = arith.constant 0 : index
      %c0_43 = arith.constant 0 : index
      %c0_44 = arith.constant 0 : index
      %38 = vector.load %arg5[%c0_42, %c0_43, %c0_44] : memref<1x8x128xf32, #tpu.memory_space<vmem>>, vector<1x8x128xf32>
      tpu.vector_store %arg5[%c0_42, %c0_43, %c0_44], %37 {strides = array<i32>} : memref<1x8x128xf32, #tpu.memory_space<vmem>>, vector<1x8x128xf32>,
    } else {
    }
    return
  }
  func.func @transform_0(%arg0: i32, %arg1: i32) -> (i32, i32, i32) {
    %c0_i32 = arith.constant 0 : i32
    %c0_i32_0 = arith.constant 0 : i32
    %c0_i32_1 = arith.constant 0 : i32
    return %arg0, %c0_i32, %c0_i32_0 : i32, i32, i32
  }
  func.func @transform_1(%arg0: i32, %arg1: i32) -> (i32, i32, i32) {
    %c0_i32 = arith.constant 0 : i32
    %c0_i32_0 = arith.constant 0 : i32
    return %arg0, %c0_i32, %arg1 : i32, i32, i32
  }
  func.func @transform_2(%arg0: i32, %arg1: i32) -> (i32, i32, i32) {
    %c0_i32 = arith.constant 0 : i32
    %c0_i32_0 = arith.constant 0 : i32
    return %arg0, %c0_i32, %arg1 : i32, i32, i32
  }
  func.func @transform_3(%arg0: i32, %arg1: i32) -> (i32, i32, i32) {
    %c0_i32 = arith.constant 0 : i32
    %c0_i32_0 = arith.constant 0 : i32
    %c0_i32_1 = arith.constant 0 : i32
    return %arg0, %c0_i32, %c0_i32_0 : i32, i32, i32
  }
}

</mosaic_0001>

<llo_original>
// kernel: tpu_custom_call.1
$region0: #{tpu_custom_call.1}
  #allocation0 [shape = 'u32[]', space=smem, size = 0x4, offset = 0x4, fixed_abs, tag = 'smem constant byte address 0x4 - core index']
  #allocation1 [shape = 'u32[144,128]{1,0:T(1,128)}', space=vmem, size = 0x12000, scoped, tag = 'internal scratch']
  #allocation2 [shape = 'f32[1,8,128]{2,1,0:T(8,128)}', space=vmem, size = 0x1000, scoped, tag = 'scratch operand']
  #allocation3 [shape = 'f32[1,8,1]{2,1,0:T(8,128)}', space=vmem, size = 0x1000, scoped, tag = 'scratch operand']
  #allocation4 [shape = 'f32[1,8,128]{2,1,0:T(8,128)}', space=vmem, size = 0x1000, scoped, tag = 'scratch operand']
  %s0 = inlined_call_operand.hbm [shape: f32[2,8,128], index: 0, kind: input, shape index: {}]
  %s1 = inlined_call_operand.hbm [shape: bf16[2,8,256], index: 1, kind: input, shape index: {}]
  %s2 = inlined_call_operand.hbm [shape: bf16[2,128,256], index: 2, kind: input, shape index: {}]
  %s3 = inlined_call_operand.hbm [shape: f32[2,8,128], index: 3, kind: output, shape index: {}]
  %s4 = sld [smem:[#allocation0]]
  $region65: #{tpu_custom_call.1} parent=0
    _
  %s6 = ssub.s32 1, %s4
  %s7 = scalar_select 0, %s6, %s4
  $region1: #{tpu_custom_call.1} parent=0
    #allocation5 [shape = 'u8[8192]{0}', space=vmem, size = 0x2000, scoped, tag = 'input window, operand 0']
    #allocation6 [shape = 's32[2]{0}', space=sflag, size = 0x8, scoped, tag = 'scoped memory for tpu_custom_call.1']
    #allocation7 [shape = 's32[2]{0}', space=sflag, size = 0x8, scoped, tag = 'scoped memory for tpu_custom_call.1']
    #allocation8 [shape = 'u8[8192]{0}', space=vmem, size = 0x2000, scoped, tag = 'input window, operand 1']
    #allocation9 [shape = 's32[2]{0}', space=sflag, size = 0x8, scoped, tag = 'scoped memory for tpu_custom_call.1']
    #allocation10 [shape = 'u8[131072]{0}', space=vmem, size = 0x20000, scoped, tag = 'input window, operand 2']
    #allocation11 [shape = 'u8[8192]{0}', space=vmem, size = 0x2000, scoped, tag = 'output window, operand 0']
    %8 = vsyncpa [#allocation6], 0
    %s9 = scalar_lea.sflag [#allocation6], 1
    %10 = vsyncpa %s9, 0
    %11 = vsyncpa [#allocation9], 0
    %s12 = scalar_lea.sflag [#allocation9], 1
    %13 = vsyncpa %s12, 0
    %14 = vsyncpa [#allocation7], 0
    %s15 = scalar_lea.sflag [#allocation7], 1
    %16 = vsyncpa %s15, 0
    loop: start=0, step=1, limit=4
    $region2: #{tpu_custom_call.1} parent=1 // loop_pre_header
      _
    $region3: #{tpu_custom_call.1} parent=1 // loop_header
      %s18 = sphi 0, %s22
      %p19 = scmp.ge.s32.totalorder %s18, 4
      %s25 = sphi 0, %s37
      %s26 = sphi 0, %s33
      %s27 = sphi 0, %s25
      %s28 = sphi 0, %s26
      %s29 = sphi 0, %s27
      %s30 = sphi 0, %s28
      %s40 = sphi 0, %s42
      %s43 = sphi 0, %s40
      %s44 = sphi 0, %s43
      %s60 = sphi 0, %s44
      %s68 = sphi 0, %s70
      %s71 = sphi 0, %s68
      %s72 = sphi 0, %s71
      %s88 = sphi 0, %s72
      %s96 = sphi 0, %s98
      %s99 = sphi 0, %s96
      %s100 = sphi 0, %s99
      %s116 = sphi 0, %s100
      %s122 = sphi 0, %s124
      %s125 = sphi 0, %s122
      %s126 = sphi 0, %s125
      %s142 = sphi 0, %s126
    $region4: #{tpu_custom_call.1} parent=1 // loop_header_branch
      %21 = sbr.rel (%p19) target = $region8
    $region5: #{tpu_custom_call.1} parent=1 // loop_body
      %s23 = ssub.s32 %s18, 1
      %s24 = ssub.s32 %s18, 2
      %s31 = sadd.s32 1, %s26
      %p32 = scmp.ge.s32.totalorder %s31, 1
      %s33 = scalar_select %p32, 0, %s31
      %s34 = sadd.s32 1, %s25
      %s35 = scalar_select %p32, %s34, %s25
      %p36 = scmp.ge.s32.totalorder %s35, 2
      %s37 = scalar_select %p36, 0, %s35
      %s38 = ssub.s32 %s25, %s37
      %p39 = scmp.eq.s32.totalorder %s38, 0
      %s41 = sadd.s32 %s40, 1
      %s42 = scalar_select %p39, %s40, %s41
      %p45 = pneg %p39
      %p46 = scmp.eq.s32.totalorder %s18, 1
      %p47 = por %p45, %p46
      %p48 = scmp.ne.s32.totalorder %s40, %s43
      %p49 = scmp.eq.s32.totalorder %s18, 0
      %p50 = por %p48, %p49
      %p51 = scmp.ne.s32.totalorder %s40, %s43
      %p52 = scmp.eq.s32.totalorder %s23, 1
      %p53 = por %p51, %p52
      %p54 = scmp.ne.s32.totalorder %s43, %s44
      %p55 = scmp.eq.s32.totalorder %s23, 0
      %p56 = por %p54, %p55
      %p57 = scmp.ne.s32.totalorder %s43, %s44
      %p58 = scmp.eq.s32.totalorder %s24, 1
      %p59 = por %p57, %p58
      %p61 = scmp.ne.s32.totalorder %s44, %s60
      %p62 = scmp.eq.s32.totalorder %s24, 0
      %p63 = por %p61, %p62
      %s64 = ssub.s32 %s25, %s37
      %s65 = ssub.s32 %s26, %s33
      %s66 = sor.u32 %s64, %s65
      %p67 = scmp.eq.s32.totalorder %s66, 0
      %s69 = sadd.s32 %s68, 1
      %s70 = scalar_select %p67, %s68, %s69
      %p73 = pneg %p67
      %p74 = scmp.eq.s32.totalorder %s18, 1
      %p75 = por %p73, %p74
      %p76 = scmp.ne.s32.totalorder %s68, %s71
      %p77 = scmp.eq.s32.totalorder %s18, 0
      %p78 = por %p76, %p77
      %p79 = scmp.ne.s32.totalorder %s68, %s71
      %p80 = scmp.eq.s32.totalorder %s23, 1
      %p81 = por %p79, %p80
      %p82 = scmp.ne.s32.totalorder %s71, %s72
      %p83 = scmp.eq.s32.totalorder %s23, 0
      %p84 = por %p82, %p83
      %p85 = scmp.ne.s32.totalorder %s71, %s72
      %p86 = scmp.eq.s32.totalorder %s24, 1
      %p87 = por %p85, %p86
      %p89 = scmp.ne.s32.totalorder %s72, %s88
      %p90 = scmp.eq.s32.totalorder %s24, 0
      %p91 = por %p89, %p90
      %s92 = ssub.s32 %s25, %s37
      %s93 = ssub.s32 %s26, %s33
      %s94 = sor.u32 %s92, %s93
      %p95 = scmp.eq.s32.totalorder %s94, 0
      %s97 = sadd.s32 %s96, 1
      %s98 = scalar_select %p95, %s96, %s97
      %p101 = pneg %p95
      %p102 = scmp.eq.s32.totalorder %s18, 1
      %p103 = por %p101, %p102
      %p104 = scmp.ne.s32.totalorder %s96, %s99
      %p105 = scmp.eq.s32.totalorder %s18, 0
      %p106 = por %p104, %p105
      %p107 = scmp.ne.s32.totalorder %s96, %s99
      %p108 = scmp.eq.s32.totalorder %s23, 1
      %p109 = por %p107, %p108
      %p110 = scmp.ne.s32.totalorder %s99, %s100
      %p111 = scmp.eq.s32.totalorder %s23, 0
      %p112 = por %p110, %p111
      %p113 = scmp.ne.s32.totalorder %s99, %s100
      %p114 = scmp.eq.s32.totalorder %s24, 1
      %p115 = por %p113, %p114
      %p117 = scmp.ne.s32.totalorder %s100, %s116
      %p118 = scmp.eq.s32.totalorder %s24, 0
      %p119 = por %p117, %p118
      %s120 = ssub.s32 %s25, %s37
      %p121 = scmp.eq.s32.totalorder %s120, 0
      %s123 = sadd.s32 %s122, 1
      %s124 = scalar_select %p121, %s122, %s123
      %p127 = pneg %p121
      %p128 = scmp.eq.s32.totalorder %s18, 1
      %p129 = por %p127, %p128
      %p130 = scmp.ne.s32.totalorder %s122, %s125
      %p131 = scmp.eq.s32.totalorder %s18, 0
      %p132 = por %p130, %p131
      %p133 = scmp.ne.s32.totalorder %s122, %s125
      %p134 = scmp.eq.s32.totalorder %s23, 1
      %p135 = por %p133, %p134
      %p136 = scmp.ne.s32.totalorder %s125, %s126
      %p137 = scmp.eq.s32.totalorder %s23, 0
      %p138 = por %p136, %p137
      %p139 = scmp.ne.s32.totalorder %s125, %s126
      %p140 = scmp.eq.s32.totalorder %s24, 1
      %p141 = por %p139, %p140
      %p143 = scmp.ne.s32.totalorder %s126, %s142
      %p144 = scmp.eq.s32.totalorder %s24, 0
      %p145 = por %p143, %p144
      %p146 = scmp.le.s32.totalorder 1, %s18
      %p147 = scmp.lt.s32.totalorder %s18, 3
      %p148 = pnand %p146, %p147
      %p149 = pneg %p148
      // Predicated region
      $region9: #{tpu_custom_call.1} parent=5 // pred_check
        _
      $region10: #{tpu_custom_call.1} parent=5 // pred_check_branch
        %151 = sbr.rel (%p148) target = $region12
      $region11: #{tpu_custom_call.1} parent=5 // pred_region
        %s152 = ssub.s32 %s18, 1
      $region12: #{tpu_custom_call.1} parent=5 // pred_fallthru
        _
      %p153 = scmp.lt.s32.totalorder %s18, 2
      // Predicated region
      $region13: #{tpu_custom_call.1} parent=5 // pred_check
        %p154 = pneg %p153
      $region14: #{tpu_custom_call.1} parent=5 // pred_check_branch
        %156 = sbr.rel (%p154) target = $region16
      $region15: #{tpu_custom_call.1} parent=5 // pred_region
        // Predicated region
        $region17: #{tpu_custom_call.1} parent=15 // pred_check
          %p157 = pneg %p50
        $region18: #{tpu_custom_call.1} parent=15 // pred_check_branch
          %159 = sbr.rel (%p157) target = $region20
        $region19: #{tpu_custom_call.1} parent=15 // pred_region
          %s160 = sand.u32 %s40, 1
          %s161 = scalar_lea.sflag [#allocation6], %s160
          %s162 = sand.u32 %s40, 1
          %s163 = smul.addr %s162, 8
          %s164 = scalar_lea.vmem [#allocation5], %s163
          %s166 = ssub.s32 128, 128
          %167 = vsyncadd %s161, %s166
          %s168 = smul.addr %s25, 128
          %s169 = scalar_lea.hbm %s0, %s168
          %s171 = sshll.u32 %s164, 4
          %s172 = int_to_ptr.vmem [resolvable:$true] %s171
          %174 = dma.hbm_to_vmem [thread:$0]  %s169, 128, %s172, %s161
        $region20: #{tpu_custom_call.1} parent=15 // pred_fallthru
          _
        // Predicated region
        $region21: #{tpu_custom_call.1} parent=15 // pred_check
          %p175 = pneg %p78
        $region22: #{tpu_custom_call.1} parent=15 // pred_check_branch
          %177 = sbr.rel (%p175) target = $region24
        $region23: #{tpu_custom_call.1} parent=15 // pred_region
          %s178 = sand.u32 %s18, 1
          %s179 = scalar_lea.sflag [#allocation9], %s178
          %s180 = sand.u32 %s68, 1
          %s181 = smul.addr %s180, 8
          %s182 = scalar_lea.vmem [#allocation8], %s181
          %s183 = smul.u32 2, %s26
          %s185 = ssub.s32 128, 128
          %186 = vsyncadd %s179, %s185
          %s187 = smul.addr %s25, 2
          %s188 = sadd.s32 %s183, %s187
          %s189 = smul.addr %s188, 64
          %s190 = scalar_lea.hbm %s1, %s189
          %s192 = sshll.u32 %s182, 4
          %s193 = int_to_ptr.vmem [resolvable:$true] %s192
          %195 = dma.hbm_to_vmem [thread:$0]  %s190, 128, %s193, %s179
        $region24: #{tpu_custom_call.1} parent=15 // pred_fallthru
          _
        // Predicated region
        $region25: #{tpu_custom_call.1} parent=15 // pred_check
          %p196 = pneg %p106
        $region26: #{tpu_custom_call.1} parent=15 // pred_check_branch
          %198 = sbr.rel (%p196) target = $region28
        $region27: #{tpu_custom_call.1} parent=15 // pred_region
          %s199 = sand.u32 %s18, 1
          %s200 = scalar_lea.sflag [#allocation9], %s199
          %s201 = sand.u32 %s96, 1
          %s202 = smul.addr %s201, 128
          %s203 = scalar_lea.vmem [#allocation10], %s202
          %s204 = smul.u32 2, %s26
          %s206 = ssub.s32 2048, 2048
          %207 = vsyncadd %s200, %s206
          %s208 = smul.addr %s25, 32
          %s209 = sadd.s32 %s204, %s208
          %s210 = smul.addr %s209, 64
          %s211 = scalar_lea.hbm %s2, %s210
          %s212 = sshll.u32 %s203, 4
          %s213 = int_to_ptr.vmem [resolvable:$true] %s212
          %218 = dma.hbm_to_vmem [thread:$0]  %s211, 2048, %s213, %s200, 128, 128, 8
        $region28: #{tpu_custom_call.1} parent=15 // pred_fallthru
          _
      $region16: #{tpu_custom_call.1} parent=5 // pred_fallthru
        _
      %p219 = scmp.le.s32.totalorder 1, %s18
      %p220 = scmp.lt.s32.totalorder %s18, 3
      %p221 = pnand %p219, %p220
      %p222 = pneg %p221
      // Predicated region
      $region29: #{tpu_custom_call.1} parent=5 // pred_check
        _
      $region30: #{tpu_custom_call.1} parent=5 // pred_check_branch
        %224 = sbr.rel (%p221) target = $region32
      $region31: #{tpu_custom_call.1} parent=5 // pred_region
        %s225 = ssub.s32 %s18, 1
        %s226 = sand.u32 %s43, 1
        %s227 = scalar_lea.sflag [#allocation6], %s226
        %s228 = sand.u32 %s43, 1
        %s229 = smul.addr %s228, 8
        %s230 = scalar_lea.vmem [#allocation5], %s229
        // Predicated region
        $region33: #{tpu_custom_call.1} parent=31 // pred_check
          %p231 = pneg %p56
        $region34: #{tpu_custom_call.1} parent=31 // pred_check_branch
          %233 = sbr.rel (%p231) target = $region36
        $region35: #{tpu_custom_call.1} parent=31 // pred_region
          %234 = dma.done %s227, 128
        $region36: #{tpu_custom_call.1} parent=31 // pred_fallthru
          _
        %s235 = sand.u32 %s23, 1
        %s236 = scalar_lea.sflag [#allocation9], %s235
        %s237 = sand.u32 %s71, 1
        %s238 = smul.addr %s237, 8
        %s239 = scalar_lea.vmem [#allocation8], %s238
        // Predicated region
        $region37: #{tpu_custom_call.1} parent=31 // pred_check
          %p240 = pneg %p84
        $region38: #{tpu_custom_call.1} parent=31 // pred_check_branch
          %242 = sbr.rel (%p240) target = $region40
        $region39: #{tpu_custom_call.1} parent=31 // pred_region
          %243 = dma.done %s236, 128
        $region40: #{tpu_custom_call.1} parent=31 // pred_fallthru
          _
        %s244 = sand.u32 %s23, 1
        %s245 = scalar_lea.sflag [#allocation9], %s244
        %s246 = sand.u32 %s99, 1
        %s247 = smul.addr %s246, 128
        %s248 = scalar_lea.vmem [#allocation10], %s247
        // Predicated region
        $region41: #{tpu_custom_call.1} parent=31 // pred_check
          %p249 = pneg %p112
        $region42: #{tpu_custom_call.1} parent=31 // pred_check_branch
          %251 = sbr.rel (%p249) target = $region44
        $region43: #{tpu_custom_call.1} parent=31 // pred_region
          %252 = dma.done %s245, 2048
        $region44: #{tpu_custom_call.1} parent=31 // pred_fallthru
          _
        %s253 = sand.u32 %s43, 1
        %s254 = scalar_lea.sflag [#allocation6], %s253
        %s255 = sand.u32 %s43, 1
        %s256 = smul.addr %s255, 8
        %s257 = scalar_lea.vmem [#allocation5], %s256
        %p258 = pneg %p56
        %p259 = pneg %p53
        %s260 = sand.u32 %s23, 1
        %s261 = scalar_lea.sflag [#allocation9], %s260
        %s262 = sand.u32 %s71, 1
        %s263 = smul.addr %s262, 8
        %s264 = scalar_lea.vmem [#allocation8], %s263
        %p265 = pneg %p84
        %p266 = pneg %p81
        %s267 = sand.u32 %s23, 1
        %s268 = scalar_lea.sflag [#allocation9], %s267
        %s269 = sand.u32 %s99, 1
        %s270 = smul.addr %s269, 128
        %s271 = scalar_lea.vmem [#allocation10], %s270
        %p272 = pneg %p112
        %p273 = pneg %p109
        %p274 = pneg %p138
        %p275 = pneg %p135
        %s276 = sand.u32 %s125, 1
        %s277 = scalar_lea.sflag [#allocation7], %s276
        %s278 = sand.u32 %s125, 1
        %s279 = smul.addr %s278, 8
        %s280 = scalar_lea.vmem [#allocation11], %s279
        %s281 = smul.u32 2, %s28
        %s282 = smul.u32 2, %s28
        %p285 = scmp.eq.s32.totalorder %s28, 0
        // Predicated region
        $region45: #{tpu_custom_call.1} parent=31 // pred_check
          %p286 = pneg %p285
        $region46: #{tpu_custom_call.1} parent=31 // pred_check_branch
          %288 = sbr.rel (%p286) target = $region48
        $region47: #{tpu_custom_call.1} parent=31 // pred_region
          %289 = vst [vmem:[#allocation2] sm:$0xff] 0.0
          %vm290 = vcmask 7168
          %291 = vst.msk [vmem:[#allocation3] sm:$0xff] %vm290, 0.0
          %292 = vst [vmem:[#allocation4] sm:$0xff] 0.0
        $region48: #{tpu_custom_call.1} parent=31 // pred_fallthru
          _
        %v293 = vld [vmem:[%s239] sm:$0xff]
        %v294 = vld [vmem:[%s248] sm:$0xff]
        %v295 = vld [vmem:[%s248 + $0x8] sm:$0xff]
        %v296 = vld [vmem:[%s248 + $0x10] sm:$0xff]
        %v297 = vld [vmem:[%s248 + $0x18] sm:$0xff]
        %v298 = vld [vmem:[%s248 + $0x20] sm:$0xff]
        %v299 = vld [vmem:[%s248 + $0x28] sm:$0xff]
        %v300 = vld [vmem:[%s248 + $0x30] sm:$0xff]
        %v301 = vld [vmem:[%s248 + $0x38] sm:$0xff]
        %v302 = vld [vmem:[%s248 + $0x40] sm:$0xff]
        %v303 = vld [vmem:[%s248 + $0x48] sm:$0xff]
        %v304 = vld [vmem:[%s248 + $0x50] sm:$0xff]
        %v305 = vld [vmem:[%s248 + $0x58] sm:$0xff]
        %v306 = vld [vmem:[%s248 + $0x60] sm:$0xff]
        %v307 = vld [vmem:[%s248 + $0x68] sm:$0xff]
        %v308 = vld [vmem:[%s248 + $0x70] sm:$0xff]
        %v309 = vld [vmem:[%s248 + $0x78] sm:$0xff]
        %v310 = vld [vmem:[#allocation2] sm:$0xff]
        %v312 = vunpack.c.l.b16 %v293
        %v313 = vunpack.c.h.b16 %v293
        %v314 = vpack.c.b16 %v312, %v312
        %v315 = vpack.c.b16 %v313, %v313
        %v334 = vunpack.c.l.b16 %v294
        %v335 = vunpack.c.h.b16 %v294
        %v336 = vunpack.c.l.b16 %v295
        %v337 = vunpack.c.h.b16 %v295
        %v338 = vunpack.c.l.b16 %v296
        %v339 = vunpack.c.h.b16 %v296
        %v340 = vunpack.c.l.b16 %v297
        %v341 = vunpack.c.h.b16 %v297
        %v342 = vunpack.c.l.b16 %v298
        %v343 = vunpack.c.h.b16 %v298
        %v344 = vunpack.c.l.b16 %v299
        %v345 = vunpack.c.h.b16 %v299
        %v346 = vunpack.c.l.b16 %v300
        %v347 = vunpack.c.h.b16 %v300
        %v348 = vunpack.c.l.b16 %v301
        %v349 = vunpack.c.h.b16 %v301
        %v350 = vunpack.c.l.b16 %v302
        %v351 = vunpack.c.h.b16 %v302
        %v352 = vunpack.c.l.b16 %v303
        %v353 = vunpack.c.h.b16 %v303
        %v354 = vunpack.c.l.b16 %v304
        %v355 = vunpack.c.h.b16 %v304
        %v356 = vunpack.c.l.b16 %v305
        %v357 = vunpack.c.h.b16 %v305
        %v358 = vunpack.c.l.b16 %v306
        %v359 = vunpack.c.h.b16 %v306
        %v360 = vunpack.c.l.b16 %v307
        %v361 = vunpack.c.h.b16 %v307
        %v362 = vunpack.c.l.b16 %v308
        %v363 = vunpack.c.h.b16 %v308
        %v364 = vunpack.c.l.b16 %v309
        %v365 = vunpack.c.h.b16 %v309
        %v366 = vpack.c.b16 %v336, %v334
        %v367 = vpack.c.b16 %v337, %v335
        %v368 = vpack.c.b16 %v340, %v338
        %v369 = vpack.c.b16 %v341, %v339
        %v370 = vpack.c.b16 %v344, %v342
        %v371 = vpack.c.b16 %v345, %v343
        %v372 = vpack.c.b16 %v348, %v346
        %v373 = vpack.c.b16 %v349, %v347
        %v374 = vpack.c.b16 %v352, %v350
        %v375 = vpack.c.b16 %v353, %v351
        %v376 = vpack.c.b16 %v356, %v354
        %v377 = vpack.c.b16 %v357, %v355
        %v378 = vpack.c.b16 %v360, %v358
        %v379 = vpack.c.b16 %v361, %v359
        %v380 = vpack.c.b16 %v364, %v362
        %v381 = vpack.c.b16 %v365, %v363
        %398 = vmatprep.subr.bf16.mxu0 %v367
        %399 = vmatpush1.bf16.xpose.msra.mxu0 %v366
        %400 = vmatprep.subr.bf16.mxu0 %v369
        %401 = vmatpush1.bf16.xpose.msra.mxu0 %v368
        %402 = vmatprep.subr.bf16.mxu0 %v371
        %403 = vmatpush1.bf16.xpose.msra.mxu0 %v370
        %404 = vmatprep.subr.bf16.mxu0 %v373
        %405 = vmatpush1.bf16.xpose.msra.mxu0 %v372
        %406 = vmatprep.subr.bf16.mxu0 %v375
        %407 = vmatpush1.bf16.xpose.msra.mxu0 %v374
        %408 = vmatprep.subr.bf16.mxu0 %v377
        %409 = vmatpush1.bf16.xpose.msra.mxu0 %v376
        %410 = vmatprep.subr.bf16.mxu0 %v379
        %411 = vmatpush1.bf16.xpose.msra.mxu0 %v378
        %412 = vmatprep.subr.bf16.mxu0 %v381
        %413 = vmatpush1.bf16.xpose.msra.mxu0 %v380
        %414 = vmatprep.subr.bf16.mxu0 0
        %415 = vmatpush1.bf16.xpose.msra.mxu0 0
        %416 = vmatprep.subr.bf16.mxu0 0
        %417 = vmatpush1.bf16.xpose.msra.mxu0 0
        %418 = vmatprep.subr.bf16.mxu0 0
        %419 = vmatpush1.bf16.xpose.msra.mxu0 0
        %420 = vmatprep.subr.bf16.mxu0 0
        %421 = vmatpush1.bf16.xpose.msra.mxu0 0
        %422 = vmatprep.subr.bf16.mxu0 0
        %423 = vmatpush1.bf16.xpose.msra.mxu0 0
        %424 = vmatprep.subr.bf16.mxu0 0
        %425 = vmatpush1.bf16.xpose.msra.mxu0 0
        %426 = vmatprep.subr.bf16.mxu0 0
        %427 = vmatpush1.bf16.xpose.msra.mxu0 0
        %428 = vmatprep.subr.bf16.mxu0 0
        %429 = vmatpush1.bf16.xpose.msra.mxu0 0
        %430 = vmatprep.mubr.bf16.mxu0 %v315
        %431 = vmatmul.mubr.bf16.gmra.mrb[0].mxu0 %v314
        %v432 = vpop.f32.mrb[0].mxu0
        %v433 = vadd.f32 0.0, %v432
        %v434 = vpop.f32.mrb[0].mxu0
        %v435 = vpop.f32.mrb[0].mxu0
        %v436 = vpop.f32.mrb[0].mxu0
        %437 = vdwg.mxu0
        %v438 = vadd.f32 %v310, %v433
        %439 = vst [vmem:[#allocation2] sm:$0xff] %v438
        %v440 = vunpack.c.l.bf16 %v293
        %v441 = vunpack.c.h.bf16 %v293
        %v442 = vld [vmem:[#allocation3] sm:$0xff]
        %v443 = vmul.f32 %v440, %v440
        %v444 = vmul.f32 %v441, %v441
        %v445 = vadd.f32 %v443, %v444
        %446 = vadd.xlane.f32.xlu0 %v445
        %v447 = vpop.xlane.xlu0 %446
        %v448 = vadd.f32 %v442, %v447
        %vm449 = vcmask 7168
        %450 = vst.msk [vmem:[#allocation3] sm:$0xff] %vm449, %v448
        %v451 = vld [vmem:[#allocation4] sm:$0xff]
        %v452 = vmul.bf16 %v294, %v294
        %v453 = vmul.bf16 %v295, %v295
        %v454 = vmul.bf16 %v296, %v296
        %v455 = vmul.bf16 %v297, %v297
        %v456 = vmul.bf16 %v298, %v298
        %v457 = vmul.bf16 %v299, %v299
        %v458 = vmul.bf16 %v300, %v300
        %v459 = vmul.bf16 %v301, %v301
        %v460 = vmul.bf16 %v302, %v302
        %v461 = vmul.bf16 %v303, %v303
        %v462 = vmul.bf16 %v304, %v304
        %v463 = vmul.bf16 %v305, %v305
        %v464 = vmul.bf16 %v306, %v306
        %v465 = vmul.bf16 %v307, %v307
        %v466 = vmul.bf16 %v308, %v308
        %v467 = vmul.bf16 %v309, %v309
        %v484 = vunpack.c.l.b16 %v452
        %v485 = vunpack.c.h.b16 %v452
        %v486 = vunpack.c.l.b16 %v453
        %v487 = vunpack.c.h.b16 %v453
        %v488 = vunpack.c.l.b16 %v454
        %v489 = vunpack.c.h.b16 %v454
        %v490 = vunpack.c.l.b16 %v455
        %v491 = vunpack.c.h.b16 %v455
        %v492 = vunpack.c.l.b16 %v456
        %v493 = vunpack.c.h.b16 %v456
        %v494 = vunpack.c.l.b16 %v457
        %v495 = vunpack.c.h.b16 %v457
        %v496 = vunpack.c.l.b16 %v458
        %v497 = vunpack.c.h.b16 %v458
        %v498 = vunpack.c.l.b16 %v459
        %v499 = vunpack.c.h.b16 %v459
        %v500 = vunpack.c.l.b16 %v460
        %v501 = vunpack.c.h.b16 %v460
        %v502 = vunpack.c.l.b16 %v461
        %v503 = vunpack.c.h.b16 %v461
        %v504 = vunpack.c.l.b16 %v462
        %v505 = vunpack.c.h.b16 %v462
        %v506 = vunpack.c.l.b16 %v463
        %v507 = vunpack.c.h.b16 %v463
        %v508 = vunpack.c.l.b16 %v464
        %v509 = vunpack.c.h.b16 %v464
        %v510 = vunpack.c.l.b16 %v465
        %v511 = vunpack.c.h.b16 %v465
        %v512 = vunpack.c.l.b16 %v466
        %v513 = vunpack.c.h.b16 %v466
        %v514 = vunpack.c.l.b16 %v467
        %v515 = vunpack.c.h.b16 %v467
        %v516 = vpack.c.b16 %v486, %v484
        %v517 = vpack.c.b16 %v487, %v485
        %v518 = vpack.c.b16 %v490, %v488
        %v519 = vpack.c.b16 %v491, %v489
        %v520 = vpack.c.b16 %v494, %v492
        %v521 = vpack.c.b16 %v495, %v493
        %v522 = vpack.c.b16 %v498, %v496
        %v523 = vpack.c.b16 %v499, %v497
        %v524 = vpack.c.b16 %v502, %v500
        %v525 = vpack.c.b16 %v503, %v501
        %v526 = vpack.c.b16 %v506, %v504
        %v527 = vpack.c.b16 %v507, %v505
        %v528 = vpack.c.b16 %v510, %v508
        %v529 = vpack.c.b16 %v511, %v509
        %v530 = vpack.c.b16 %v514, %v512
        %v531 = vpack.c.b16 %v515, %v513
        %548 = vmatprep.subr.bf16.mxu0 %v517
        %549 = vmatpush1.bf16.xpose.msra.mxu0 %v516
        %550 = vmatprep.subr.bf16.mxu0 %v519
        %551 = vmatpush1.bf16.xpose.msra.mxu0 %v518
        %552 = vmatprep.subr.bf16.mxu0 %v521
        %553 = vmatpush1.bf16.xpose.msra.mxu0 %v520
        %554 = vmatprep.subr.bf16.mxu0 %v523
        %555 = vmatpush1.bf16.xpose.msra.mxu0 %v522
        %556 = vmatprep.subr.bf16.mxu0 %v525
        %557 = vmatpush1.bf16.xpose.msra.mxu0 %v524
        %558 = vmatprep.subr.bf16.mxu0 %v527
        %559 = vmatpush1.bf16.xpose.msra.mxu0 %v526
        %560 = vmatprep.subr.bf16.mxu0 %v529
        %561 = vmatpush1.bf16.xpose.msra.mxu0 %v528
        %562 = vmatprep.subr.bf16.mxu0 %v531
        %563 = vmatpush1.bf16.xpose.msra.mxu0 %v530
        %564 = vmatprep.subr.bf16.mxu0 0
        %565 = vmatpush1.bf16.xpose.msra.mxu0 0
        %566 = vmatprep.subr.bf16.mxu0 0
        %567 = vmatpush1.bf16.xpose.msra.mxu0 0
        %568 = vmatprep.subr.bf16.mxu0 0
        %569 = vmatpush1.bf16.xpose.msra.mxu0 0
        %570 = vmatprep.subr.bf16.mxu0 0
        %571 = vmatpush1.bf16.xpose.msra.mxu0 0
        %572 = vmatprep.subr.bf16.mxu0 0
        %573 = vmatpush1.bf16.xpose.msra.mxu0 0
        %574 = vmatprep.subr.bf16.mxu0 0
        %575 = vmatpush1.bf16.xpose.msra.mxu0 0
        %576 = vmatprep.subr.bf16.mxu0 0
        %577 = vmatpush1.bf16.xpose.msra.mxu0 0
        %578 = vmatprep.subr.bf16.mxu0 0
        %579 = vmatpush1.bf16.xpose.msra.mxu0 0
        %580 = vmatprep.mubr.bf16.mxu0 1065369472
        %581 = vmatmul.mubr.bf16.gmra.mrb[0].mxu0 1065369472
        %v582 = vpop.f32.mrb[0].mxu0
        %v583 = vadd.f32 0.0, %v582
        %v584 = vpop.f32.mrb[0].mxu0
        %v585 = vpop.f32.mrb[0].mxu0
        %v586 = vpop.f32.mrb[0].mxu0
        %587 = vdwg.mxu0
        %v588 = vadd.f32 %v451, %v583
        %589 = vst [vmem:[#allocation4] sm:$0xff] %v588
        // Predicated region
        $region49: #{tpu_custom_call.1} parent=31 // pred_check
          %p590 = pneg %p285
        $region50: #{tpu_custom_call.1} parent=31 // pred_check_branch
          %592 = sbr.rel (%p590) target = $region52
        $region51: #{tpu_custom_call.1} parent=31 // pred_region
          %v593 = vld [vmem:[#allocation3] sm:$0xff]
          %v594 = vld [vmem:[#allocation4] sm:$0xff]
          %596 = vset.pattern.permute.xlu0 0
          %597 = vperm.xlu0 %596, %v593
          %v598 = vpop.permute.xlu0 %597
          %v600 = vlaneseq
          %v601 = vshrl.u32 %v600, 7
          %v602 = vsub.s32 0, %v601
          %v603 = vrot.slane %v594, %v602
          %v604 = vadd.f32 %v598, %v603
          %v605 = vld [vmem:[#allocation2] sm:$0xff]
          %v606 = vmul.f32 %v605, 2.0
          %v607 = vrcp.pop %v604
          %v608 = vmul.f32 %v606, %v607
          %v609 = vld [vmem:[%s230] sm:$0xff]
          %v610 = vmul.f32 %v609, %v608
          %611 = vst [vmem:[%s280] sm:$0xff] %v610
        $region52: #{tpu_custom_call.1} parent=31 // pred_fallthru
          _
        %s612 = sand.u32 %s125, 1
        %s613 = scalar_lea.sflag [#allocation7], %s612
        %s614 = sand.u32 %s125, 1
        %s615 = smul.addr %s614, 8
        %s616 = scalar_lea.vmem [#allocation11], %s615
        // Predicated region
        $region53: #{tpu_custom_call.1} parent=31 // pred_check
          %p617 = pneg %p135
        $region54: #{tpu_custom_call.1} parent=31 // pred_check_branch
          %619 = sbr.rel (%p617) target = $region56
        $region55: #{tpu_custom_call.1} parent=31 // pred_region
          %s621 = ssub.s32 128, 128
          %622 = vsyncadd %s613, %s621
          %s623 = smul.addr %s27, 128
          %s624 = scalar_lea.hbm %s3, %s623
          %s626 = sshll.u32 %s616, 4
          %s627 = int_to_ptr.vmem [resolvable:$true] %s626
          %629 = dma.vmem_to_hbm [thread:$0]  %s627, 128, %s624, %s613
        $region56: #{tpu_custom_call.1} parent=31 // pred_fallthru
          _
      $region32: #{tpu_custom_call.1} parent=5 // pred_fallthru
        _
      %p630 = scmp.le.s32.totalorder 2, %s18
      // Predicated region
      $region57: #{tpu_custom_call.1} parent=5 // pred_check
        %p631 = pneg %p630
      $region58: #{tpu_custom_call.1} parent=5 // pred_check_branch
        %633 = sbr.rel (%p631) target = $region60
      $region59: #{tpu_custom_call.1} parent=5 // pred_region
        %s634 = ssub.s32 %s18, 2
        // Predicated region
        $region61: #{tpu_custom_call.1} parent=59 // pred_check
          %p635 = pneg %p141
        $region62: #{tpu_custom_call.1} parent=59 // pred_check_branch
          %637 = sbr.rel (%p635) target = $region64
        $region63: #{tpu_custom_call.1} parent=59 // pred_region
          %s638 = sand.u32 %s126, 1
          %s639 = scalar_lea.sflag [#allocation7], %s638
          %s640 = sand.u32 %s126, 1
          %s641 = smul.addr %s640, 8
          %s642 = scalar_lea.vmem [#allocation11], %s641
          %643 = dma.done %s639, 128
        $region64: #{tpu_custom_call.1} parent=59 // pred_fallthru
          _
      $region60: #{tpu_custom_call.1} parent=5 // pred_fallthru
        _
    $region6: #{tpu_custom_call.1} parent=1 // loop_footer
      %s22 = sadd.s32 1, %s18
    $region7: #{tpu_custom_call.1} parent=1 // loop_footer_branch
      %17 = sbr.rel target = $region3
    $region8: #{tpu_custom_call.1} parent=1 // loop_exit
      _
    %644 = vsyncpa [#allocation6], 1
    %s645 = scalar_lea.sflag [#allocation6], 1
    %646 = vsyncpa %s645, 1
    %647 = vsyncpa [#allocation9], 1
    %s648 = scalar_lea.sflag [#allocation9], 1
    %649 = vsyncpa %s648, 1
    %650 = vsyncpa [#allocation7], 1
    %s651 = scalar_lea.sflag [#allocation7], 1
    %652 = vsyncpa %s651, 1

</llo_original>
